<compile_context>
chip_gen: v6e
topology: v6e:2x2x1
jax: 0.10.0
libtpu: 0.0.40
codegen_flags: <defaults>
</compile_context>

<pallas_src>
from functools import partial

import numpy as np
import jax
import jax.numpy as jnp
from jax.experimental import pallas as pl
from jax.experimental.pallas import tpu as pltpu

EPS = 1e-5  # ComplexBatchNorm eps


# ----------------------------- Pallas kernels --------------------------------
def matmul_stats_kernel(half, w_ref, lim_ref, col_ref, x_ref, z_ref, st_ref, acc_ref):
    """Pass 1: Z = W_all @ patchesT tile (all stride^2 phases at once) + BN raw sums.

    w_ref  : (C2, Kd)        bf16, VMEM-resident   (C2 = 2*s^2*Cout, Kd = U*U*2*Cin)
    lim_ref: (C2, 2)         int32, resident       per-row [OH - beta_h, OW - beta_w]
    col_ref: (2, TILE_M)     int32, streamed       per-col [s*q_h, s*q_w] (huge if pad col)
    x_ref  : (1, Kd, TILE_M) bf16, streamed        shared NCHW im2col patches
    z_ref  : (1, C2, TILE_M) bf16                  rows = (part[r,i], phase, channel)
    st_ref : (1, C2, 3)      f32                   written once per batch element
    acc_ref: (C2, 3)         f32 scratch           cols = [sum z, sum z^2, sum z_r*z_i]
    """
    j = pl.program_id(1)

    @pl.when(j == 0)
    def _():
        acc_ref[...] = jnp.zeros_like(acc_ref)

    z = jnp.dot(w_ref[...], x_ref[0], preferred_element_type=jnp.float32)
    z_ref[0] = z.astype(z_ref.dtype)

    # Exclude phase-overhang / lane-padding columns from the statistics so that
    # ComplexBatchNorm only sees true output positions.
    valid = (col_ref[0:1, :] < lim_ref[:, 0:1]) & (col_ref[1:2, :] < lim_ref[:, 1:2])
    zm = jnp.where(valid, z, 0.0)
    # Swap the real/imag halves (first/second half of the sublane axis) on the XLU.
    # NOTE: relies on row layout [all real rows ; all imag rows] with matching order.
    zs = pltpu.roll(zm, shift=half, axis=0)
    acc_ref[...] += jnp.concatenate(
        [jnp.sum(zm, axis=1, keepdims=True),
         jnp.sum(zm * zm, axis=1, keepdims=True),
         jnp.sum(zm * zs, axis=1, keepdims=True)],
        axis=1,
    )

    @pl.when(j == pl.num_programs(1) - 1)
    def _():
        st_ref[0] = acc_ref[...]


def norm_act_kernel(half, slope, coef_ref, z_ref, y_ref):
    """Pass 2: folded whitening + affine (2x2 per channel) + CLeakyReLU.

    coef_ref : (C2, 3) f32 resident; y = C1*z + C2*swap(z) + B
    z_ref    : (1, C2, TILE_M) bf16
    y_ref    : (1, C2, TILE_M) f32
    """
    z = z_ref[0].astype(jnp.float32)
    zs = pltpu.roll(z, shift=half, axis=0)
    y = coef_ref[:, 0:1] * z + coef_ref[:, 1:2] * zs + coef_ref[:, 2:3]
    y_ref[0] = jnp.where(y >= 0, y, slope * y)


# ------------------------------ JAX glue -------------------------------------
def pad2d_as_nchw(x1, x2):
    dh = x2.shape[2] - x1.shape[2]
    dw = x2.shape[3] - x1.shape[3]
    return jnp.pad(x1, ((0, 0), (0, 0), (0, dh), (0, dw)))


def _round_up(x, m):
    return ((x + m - 1) // m) * m


def _ceil_div(a, b):
    return -(-a // b)


def _phase_taps(K, s, p):
    """Per output phase beta: (first kernel tap, #taps, base input offset e)."""
    info = []
    for beta in range(s):
        k0 = (beta + p) % s
        t_cnt = 0 if k0 >= K else _ceil_div(K - k0, s)
        e = (beta + p - k0) // s
        info.append((k0, t_cnt, e))
    lo = min(e - t + 1 for (_, t, e) in info if t > 0)
    hi = max(e for (_, t, e) in info if t > 0)
    return info, lo, hi


def decoder_forward(xr, xi, skip, params, stride, padding, slope):
    wre, wim, bn = params["wre"], params["wim"], params["bn"]
    if skip is not None:
        xr = jnp.concatenate([pad2d_as_nchw(xr, skip[0]), skip[0]], axis=1)
        xi = jnp.concatenate([pad2d_as_nchw(xi, skip[1]), skip[1]], axis=1)

    N, Cin, H, W = xr.shape
    Cin_w, Cout, K, _ = wre.shape
    assert Cin == Cin_w
    s = stride
    OH = (H - 1) * s - 2 * padding + K
    OW = (W - 1) * s - 2 * padding + K
    OHq, OWq = _ceil_div(OH, s), _ceil_div(OW, s)
    Mq = OHq * OWq

    # ---- stride^2 phase decomposition: each output phase is a dense correlation over
    # the ORIGINAL input with tap offsets in [lo, hi]; all phases share one patch matrix.
    info, lo, hi = _phase_taps(K, s, padding)
    U = hi - lo + 1
    Kd = U * U * 2 * Cin
    C2 = 2 * s * s * Cout          # rows = (part[r,i], phase, channel)
    half = s * s * Cout            # roll shift that swaps the real/imag row halves

    # ---- shared im2col, built entirely in NCHW (no large XLA transposes).
    x_cat = jnp.concatenate([xr, xi], axis=1).astype(jnp.bfloat16)   # (N, 2Cin, H, W)
    pad_t = max(0, -lo)
    pad_b = max(0, OHq - 1 + hi - (H - 1))
    pad_l = max(0, -lo)
    pad_r = max(0, OWq - 1 + hi - (W - 1))
    x_pad = jnp.pad(x_cat, ((0, 0), (0, 0), (pad_t, pad_b), (pad_l, pad_r)))
    h0, w0 = pad_t + lo, pad_l + lo
    taps = jnp.stack(
        [x_pad[:, :, h0 + uh:h0 + uh + OHq, w0 + uw:w0 + uw + OWq]
         for uh in range(U) for uw in range(U)],
        axis=1,
    )                                                                # (N, U*U, 2Cin, OHq, OWq)
    patches_t = taps.reshape(N, Kd, Mq)                              # contiguous merges

    # ---- M tiling on the lane axis, sized from a VMEM budget (v7x-safe), not a 512 cap.
    per_col = max(2 * (Kd * 2 + C2 * 2 + 8),    # pass 1: patches bf16 + Z bf16 + col info
                  2 * (C2 * 2 + C2 * 4))        # pass 2: Z in bf16 + Y out f32
    budget = 20 * 1024 * 1024
    cap = max(128, min(8192, (budget // per_col) // 128 * 128))
    TILE_M = min(cap, _round_up(Mq, 128))
    if N == 1 and Mq > 128:
        # keep >= 2 grid steps so both v7x TensorCores get work
        TILE_M = min(TILE_M, _round_up(_ceil_div(Mq, 2), 128))
    Mq_pad = _round_up(Mq, TILE_M)
    J = Mq_pad // TILE_M
    patches_t = jnp.pad(patches_t, ((0, 0), (0, 0), (0, Mq_pad - Mq)))

    # ---- block weight matrix (C2, Kd): every phase's complex sub-kernel on its rows.
    Wb = jnp.zeros((2, s, s, Cout, U, U, 2, Cin), jnp.float32)
    for bh in range(s):
        kh0, Th, eh = info[bh]
        for bw in range(s):
            kw0, Tw, ew = info[bw]
            for th in range(Th):
                kh, uh = kh0 + s * th, eh - th - lo
                for tw in range(Tw):
                    kw, uw = kw0 + s * tw, ew - tw - lo
                    wr = wre[:, :, kh, kw].T      # (Cout, Cin)
                    wi = wim[:, :, kh, kw].T
                    Wb = Wb.at[0, bh, bw, :, uh, uw, 0, :].set(wr)
                    Wb = Wb.at[0, bh, bw, :, uh, uw, 1, :].set(-wi)
                    Wb = Wb.at[1, bh, bw, :, uh, uw, 0, :].set(wi)
                    Wb = Wb.at[1, bh, bw, :, uh, uw, 1, :].set(wr)
    w2 = Wb.reshape(C2, Kd).astype(jnp.bfloat16)

    # ---- static per-row / per-column index info for the statistics mask.
    beta_h = np.repeat(np.arange(s), s)
    beta_w = np.tile(np.arange(s), s)
    lim = np.stack([OH - beta_h, OW - beta_w], axis=1)               # (s^2, 2)
    philim = jnp.asarray(np.tile(np.repeat(lim, Cout, axis=0), (2, 1)), jnp.int32)

    m_idx = np.arange(Mq_pad)
    qh, qw = m_idx // OWq, m_idx % OWq
    big = np.int32(1 << 30)
    colinfo = jnp.asarray(
        np.stack([np.where(m_idx < Mq, qh * s, big),
                  np.where(m_idx < Mq, qw * s, big)], axis=0), jnp.int32)  # (2, Mq_pad)

    # ---- pass 1: tiled matmul (all phases) + masked BN raw sums -----------------------
    z_store, st = pl.pallas_call(
        partial(matmul_stats_kernel, half),
        grid=(N, J),
        in_specs=[
            pl.BlockSpec((C2, Kd), lambda n, j: (0, 0)),             # resident weights
            pl.BlockSpec((C2, 2), lambda n, j: (0, 0)),              # resident row limits
            pl.BlockSpec((2, TILE_M), lambda n, j: (0, j)),          # per-column info
            pl.BlockSpec((1, Kd, TILE_M), lambda n, j: (n, 0, j)),   # streamed patches
        ],
        out_specs=(
            pl.BlockSpec((1, C2, TILE_M), lambda n, j: (n, 0, j)),
            pl.BlockSpec((1, C2, 3), lambda n, j: (n, 0, 0)),
        ),
        out_shape=(
            jax.ShapeDtypeStruct((N, C2, Mq_pad), jnp.bfloat16),     # Z in bf16
            jax.ShapeDtypeStruct((N, C2, 3), jnp.float32),
        ),
        scratch_shapes=[pltpu.VMEM((C2, 3), jnp.float32)],
        compiler_params=pltpu.CompilerParams(
            dimension_semantics=("parallel", "arbitrary"),   # j carries the stats scratch
            vmem_limit_bytes=32 * 1024 * 1024,
        ),
    )(w2, philim, colinfo, patches_t)

    # ---- global ComplexBatchNorm statistics -> folded per-row 2x2 whitening + affine.
    # TODO(synk): for very large N*OH*OW the E[z^2]-mean^2 form can cancel; switch this
    # tiny reduction to f64/Welford on the host if that regime matters.
    m_true = float(N * OH * OW)
    stc = jnp.sum(st, axis=0).reshape(2, s * s, Cout, 3).sum(axis=1)   # (2, Cout, 3)
    mean, ez2, ezw = stc[:, :, 0] / m_true, stc[:, :, 1] / m_true, stc[:, :, 2] / m_true
    mr, mi = mean[0], mean[1]
    vrr = ez2[0] - mr * mr + EPS
    vii = ez2[1] - mi * mi + EPS
    vri = ezw[0] - mr * mi
    tau = vrr + vii
    delta = vrr * vii - vri * vri
    sq = jnp.sqrt(delta)
    tt = jnp.sqrt(tau + 2.0 * sq)
    rst = 1.0 / (sq * tt)
    urr, uii, uri = (sq + vii) * rst, (sq + vrr) * rst, -vri * rst

    wrr, wri, wii, br, bi = bn[0], bn[1], bn[2], bn[3], bn[4]
    zrr = wrr * urr + wri * uri
    zri = wrr * uri + wri * uii
    zir = wri * urr + wii * uri
    zii = wri * uri + wii * uii
    br2 = br - zrr * mr - zri * mi
    bi2 = bi - zir * mr - zii * mi
    rep = s * s
    coef = jnp.stack(
        [jnp.concatenate([jnp.tile(zrr, rep), jnp.tile(zii, rep)]),
         jnp.concatenate([jnp.tile(zri, rep), jnp.tile(zir, rep)]),
         jnp.concatenate([jnp.tile(br2, rep), jnp.tile(bi2, rep)])],
        axis=1,
    ).astype(jnp.float32)                                              # (C2, 3)

    # ---- pass 2: normalize + CLeakyReLU -----------------------------------------------
    y = pl.pallas_call(
        partial(norm_act_kernel, half, slope),
        grid=(N, J),
        in_specs=[
            pl.BlockSpec((C2, 3), lambda n, j: (0, 0)),               # resident coefs
            pl.BlockSpec((1, C2, TILE_M), lambda n, j: (n, 0, j)),
        ],
        out_specs=pl.BlockSpec((1, C2, TILE_M), lambda n, j: (n, 0, j)),
        out_shape=jax.ShapeDtypeStruct((N, C2, Mq_pad), jnp.float32),
        compiler_params=pltpu.CompilerParams(
            dimension_semantics=("parallel", "parallel"),
            vmem_limit_bytes=32 * 1024 * 1024,
        ),
    )(coef, z_store)

    # ---- single phase interleave (depth-to-space) + unpad back to NCHW.
    # TODO(synk): one output-sized XLA copy; writing it from pass 2 directly would need
    # non-lane-dense stores, so it stays here.
    y = y[:, :, :Mq].reshape(N, 2, s, s, Cout, OHq, OWq)
    y = jnp.transpose(y, (0, 1, 4, 5, 2, 6, 3)).reshape(N, 2, Cout, OHq * s, OWq * s)
    y = y[:, :, :, :OH, :OW]
    return y[:, 0], y[:, 1]


# --------------------------- numpy reference ----------------------------------
def ref_decoder(xr, xi, skip, wre, wim, bn, stride, padding, slope):
    xr = np.asarray(xr, np.float64)
    xi = np.asarray(xi, np.float64)
    skr = np.asarray(skip[0], np.float64)
    ski = np.asarray(skip[1], np.float64)
    wre = np.asarray(wre, np.float64)
    wim = np.asarray(wim, np.float64)
    bn = np.asarray(bn, np.float64)

    def padcat(a, sk):
        dh = sk.shape[2] - a.shape[2]
        dw = sk.shape[3] - a.shape[3]
        a = np.pad(a, ((0, 0), (0, 0), (0, dh), (0, dw)))
        return np.concatenate([a, sk], axis=1)

    xr = padcat(xr, skr)
    xi = padcat(xi, ski)

    def convT(x, w):  # direct definition of nn.ConvTranspose2d (bias=False)
        N, Cin, H, W = x.shape
        _, Cout, K, _ = w.shape
        OH = (H - 1) * stride - 2 * padding + K
        OW = (W - 1) * stride - 2 * padding + K
        out = np.zeros((N, Cout, OH, OW))
        for ih in range(H):
            for iw in range(W):
                for kh in range(K):
                    for kw in range(K):
                        oh = ih * stride - padding + kh
                        ow = iw * stride - padding + kw
                        if 0 <= oh < OH and 0 <= ow < OW:
                            out[:, :, oh, ow] += np.einsum(
                                "nc,cd->nd", x[:, :, ih, iw], w[:, :, kh, kw]
                            )
        return out

    cr = convT(xr, wre) - convT(xi, wim)
    ci = convT(xi, wre) + convT(xr, wim)

    ax = (0, 2, 3)
    mr, mi = cr.mean(ax, keepdims=True), ci.mean(ax, keepdims=True)
    cr, ci = cr - mr, ci - mi
    vrr = (cr * cr).mean(ax, keepdims=True) + EPS
    vri = (cr * ci).mean(ax, keepdims=True)
    vii = (ci * ci).mean(ax, keepdims=True) + EPS
    tau = vrr + vii
    delta = vrr * vii - vri * vri
    s = np.sqrt(delta)
    t = np.sqrt(tau + 2 * s)
    rst = 1.0 / (s * t)
    urr, uii, uri = (s + vii) * rst, (s + vrr) * rst, -vri * rst

    Wrr = bn[0][None, :, None, None]
    Wri = bn[1][None, :, None, None]
    Wii = bn[2][None, :, None, None]
    Br = bn[3][None, :, None, None]
    Bi = bn[4][None, :, None, None]
    zrr = Wrr * urr + Wri * uri
    zri = Wrr * uri + Wri * uii
    zir = Wri * urr + Wii * uri
    zii = Wri * uri + Wii * uii
    yr = zrr * cr + zri * ci + Br
    yi = zir * cr + zii * ci + Bi
    yr = np.where(yr >= 0, yr, slope * yr)
    yi = np.where(yi >= 0, yi, slope * yi)
    return yr, yi


# ----------------------------------- main --------------------------------------
if __name__ == "__main__":
    key = jax.random.PRNGKey(0)
    ks = jax.random.split(key, 8)

    N, Cx, Hx, Wx = 2, 4, 8, 8       # decoder input
    Cs, Hs, Ws = 4, 9, 9             # skip connection (slightly larger -> exercises pad2d_as)
    Cin, Cout, K = Cx + Cs, 4, 3     # dconv_cfg = (Cin, Cout, K, stride, padding), bias=False
    stride, padding, slope = 2, 1, 0.1

    xr = jax.random.normal(ks[0], (N, Cx, Hx, Wx), jnp.float32)
    xi = jax.random.normal(ks[1], (N, Cx, Hx, Wx), jnp.float32)
    skr = jax.random.normal(ks[2], (N, Cs, Hs, Ws), jnp.float32)
    ski = jax.random.normal(ks[3], (N, Cs, Hs, Ws), jnp.float32)

    wre = 0.1 * jax.random.normal(ks[4], (Cin, Cout, K, K), jnp.float32)
    wim = 0.1 * jax.random.normal(ks[5], (Cin, Cout, K, K), jnp.float32)
    bn = jnp.stack(
        [
            jnp.ones((Cout,), jnp.float32),                               # Wrr
            0.3 * jax.random.normal(ks[6], (Cout,), dtype=jnp.float32),   # Wri
            jnp.ones((Cout,), jnp.float32),                               # Wii
            0.1 * jax.random.normal(ks[7], (Cout,), dtype=jnp.float32),   # Br
            jnp.zeros((Cout,), jnp.float32),                              # Bi
        ],
        axis=0,
    )
    params = dict(wre=wre, wim=wim, bn=bn)

    fwd = jax.jit(partial(decoder_forward, stride=stride, padding=padding, slope=slope))
    yr, yi = fwd(xr, xi, (skr, ski), params)
    jax.block_until_ready((yr, yi))

    ryr, ryi = ref_decoder(xr, xi, (skr, ski), wre, wim, bn, stride, padding, slope)
    np.testing.assert_allclose(np.asarray(yr), ryr, rtol=2e-2, atol=2e-2)
    np.testing.assert_allclose(np.asarray(yi), ryi, rtol=2e-2, atol=2e-2)

    print("KERNEL_OK")
</pallas_src>

<mosaic_0001>
module attributes {stable_mosaic.version = 11 : i64} {
  func.func @matmul_stats_kernel(%arg0: i32, %arg1: i32, %arg2: memref<32x64xbf16, #tpu.memory_space<vmem>>, %arg3: memref<32x2xi32, #tpu.memory_space<vmem>>, %arg4: memref<2x128xi32, #tpu.memory_space<vmem>>, %arg5: memref<1x64x128xbf16, #tpu.memory_space<vmem>>, %arg6: memref<1x32x128xbf16, #tpu.memory_space<vmem>>, %arg7: memref<1x32x3xf32, #tpu.memory_space<vmem>>, %arg8: memref<32x3xf32, #tpu.memory_space<vmem>>) attributes {dimension_semantics = [#tpu.dimension_semantics<parallel>, #tpu.dimension_semantics<arbitrary>], iteration_bounds = array<i64: 2, 1>, scalar_prefetch = 0 : i64, scratch_operands = 1 : i64, tpu.core_type = #tpu.core_type<tc>, window_params = [{pipeline_mode = #tpu.pipeline_mode<synchronous>, transform_indices = @transform_0, window_bounds = array<i64: 32, 64>}, {pipeline_mode = #tpu.pipeline_mode<synchronous>, transform_indices = @transform_1, window_bounds = array<i64: 32, 2>}, {transform_indices = @transform_2, window_bounds = array<i64: 2, 128>}, {transform_indices = @transform_3, window_bounds = array<i64: 1, 64, 128>}, {transform_indices = @transform_4, window_bounds = array<i64: 1, 32, 128>}, {transform_indices = @transform_5, window_bounds = array<i64: 1, 32, 3>}]} {
    %c0_i32 = arith.constant 0 : i32
    %0 = arith.cmpi eq, %arg1, %c0_i32 : i32
    %1 = arith.extui %0 : i1 to i32
    %c0_i32_0 = arith.constant 0 : i32
    %2 = arith.cmpi ne, %1, %c0_i32_0 : i32
    scf.if %2 {
      %cst_25 = arith.constant 0.000000e+00 : f32
      %40 = vector.broadcast %cst_25 : f32 to vector<32x3xf32>
      %c0_26 = arith.constant 0 : index
      %c0_27 = arith.constant 0 : index
      %41 = vector.load %arg8[%c0_26, %c0_27] : memref<32x3xf32, #tpu.memory_space<vmem>>, vector<32x3xf32>
      tpu.vector_store %arg8[%c0_26, %c0_27], %40 {strides = array<i32>} : memref<32x3xf32, #tpu.memory_space<vmem>>, vector<32x3xf32>,
    } else {
    }
    %c0 = arith.constant 0 : index
    %c0_1 = arith.constant 0 : index
    %3 = vector.load %arg2[%c0, %c0_1] : memref<32x64xbf16, #tpu.memory_space<vmem>>, vector<32x64xbf16>
    %c0_2 = arith.constant 0 : index
    %c0_3 = arith.constant 0 : index
    %c0_4 = arith.constant 0 : index
    %4 = vector.load %arg5[%c0_2, %c0_3, %c0_4] : memref<1x64x128xbf16, #tpu.memory_space<vmem>>, vector<1x64x128xbf16>
    %5 = vector.shape_cast %4 : vector<1x64x128xbf16> to vector<64x128xbf16>
    %cst = arith.constant dense<0.000000e+00> : vector<32x128xf32>
    %6 = tpu.matmul %3, %5, %cst {dimension_numbers = #tpu.dot_dimension_numbers<[1], [0], [0], [1], [0, 0, 1, 1], [], []>} : vector<32x64xbf16>, vector<64x128xbf16>, vector<32x128xf32> -> vector<32x128xf32>
    %7 = arith.truncf %6 : vector<32x128xf32> to vector<32x128xbf16>
    %c0_5 = arith.constant 0 : index
    %c0_6 = arith.constant 0 : index
    %c0_7 = arith.constant 0 : index
    %8 = vector.load %arg6[%c0_5, %c0_6, %c0_7] : memref<1x32x128xbf16, #tpu.memory_space<vmem>>, vector<1x32x128xbf16>
    %9 = vector.shape_cast %8 : vector<1x32x128xbf16> to vector<32x128xbf16>
    %10 = vector.shape_cast %7 : vector<32x128xbf16> to vector<1x32x128xbf16>
    tpu.vector_store %arg6[%c0_5, %c0_6, %c0_7], %10 {strides = array<i32>} : memref<1x32x128xbf16, #tpu.memory_space<vmem>>, vector<1x32x128xbf16>,
    %c0_8 = arith.constant 0 : index
    %c0_9 = arith.constant 0 : index
    %11 = vector.load %arg4[%c0_8, %c0_9] : memref<2x128xi32, #tpu.memory_space<vmem>>, vector<1x128xi32>
    %c0_10 = arith.constant 0 : index
    %c0_11 = arith.constant 0 : index
    %12 = vector.load %arg3[%c0_10, %c0_11] : memref<32x2xi32, #tpu.memory_space<vmem>>, vector<32x1xi32>
    %13 = vector.broadcast %11 : vector<1x128xi32> to vector<32x128xi32>
    %14 = vector.broadcast %12 : vector<32x1xi32> to vector<32x128xi32>
    %15 = arith.cmpi slt, %13, %14 : vector<32x128xi32>
    %c1 = arith.constant 1 : index
    %c0_12 = arith.constant 0 : index
    %16 = vector.load %arg4[%c1, %c0_12] : memref<2x128xi32, #tpu.memory_space<vmem>>, vector<1x128xi32>
    %c0_13 = arith.constant 0 : index
    %c1_14 = arith.constant 1 : index
    %17 = vector.load %arg3[%c0_13, %c1_14] : memref<32x2xi32, #tpu.memory_space<vmem>>, vector<32x1xi32>
    %18 = vector.broadcast %16 : vector<1x128xi32> to vector<32x128xi32>
    %19 = vector.broadcast %17 : vector<32x1xi32> to vector<32x128xi32>
    %20 = arith.cmpi slt, %18, %19 : vector<32x128xi32>
    %21 = arith.andi %15, %20 : vector<32x128xi1>
    %cst_15 = arith.constant 0.000000e+00 : f32
    %22 = vector.broadcast %cst_15 : f32 to vector<32x128xf32>
    %23 = arith.select %21, %6, %22 : vector<32x128xi1>, vector<32x128xf32>
    %c16_i32 = arith.constant 16 : i32
    %24 = tpu.dynamic_rotate %23 by %c16_i32 dim 0 : vector<32x128xf32>, i32 -> vector<32x128xf32>
    %c0_16 = arith.constant 0 : index
    %c0_17 = arith.constant 0 : index
    %25 = vector.load %arg8[%c0_16, %c0_17] : memref<32x3xf32, #tpu.memory_space<vmem>>, vector<32x3xf32>
    %cst_18 = arith.constant dense<0.000000e+00> : vector<32xf32>
    %26 = vector.multi_reduction <add>, %23, %cst_18 [1] : vector<32x128xf32> to vector<32xf32>
    %27 = vector.shape_cast %26 : vector<32xf32> to vector<32x1xf32>
    %28 = arith.mulf %23, %23 : vector<32x128xf32>
    %cst_19 = arith.constant dense<0.000000e+00> : vector<32xf32>
    %29 = vector.multi_reduction <add>, %28, %cst_19 [1] : vector<32x128xf32> to vector<32xf32>
    %30 = vector.shape_cast %29 : vector<32xf32> to vector<32x1xf32>
    %31 = arith.mulf %23, %24 : vector<32x128xf32>
    %cst_20 = arith.constant dense<0.000000e+00> : vector<32xf32>
    %32 = vector.multi_reduction <add>, %31, %cst_20 [1] : vector<32x128xf32> to vector<32xf32>
    %33 = vector.shape_cast %32 : vector<32xf32> to vector<32x1xf32>
    %34 = tpu.concatenate %27, %30, %33 in 1 : vector<32x1xf32>, vector<32x1xf32>, vector<32x1xf32> -> vector<32x3xf32>
    %35 = arith.addf %25, %34 : vector<32x3xf32>
    %c0_21 = arith.constant 0 : index
    %c0_22 = arith.constant 0 : index
    %36 = vector.load %arg8[%c0_21, %c0_22] : memref<32x3xf32, #tpu.memory_space<vmem>>, vector<32x3xf32>
    tpu.vector_store %arg8[%c0_21, %c0_22], %35 {strides = array<i32>} : memref<32x3xf32, #tpu.memory_space<vmem>>, vector<32x3xf32>,
    %c0_i32_23 = arith.constant 0 : i32
    %37 = arith.cmpi eq, %arg1, %c0_i32_23 : i32
    %38 = arith.extui %37 : i1 to i32
    %c0_i32_24 = arith.constant 0 : i32
    %39 = arith.cmpi ne, %38, %c0_i32_24 : i32
    scf.if %39 {
      %c0_25 = arith.constant 0 : index
      %c0_26 = arith.constant 0 : index
      %40 = vector.load %arg8[%c0_25, %c0_26] : memref<32x3xf32, #tpu.memory_space<vmem>>, vector<32x3xf32>
      %c0_27 = arith.constant 0 : index
      %c0_28 = arith.constant 0 : index
      %c0_29 = arith.constant 0 : index
      %41 = vector.load %arg7[%c0_27, %c0_28, %c0_29] : memref<1x32x3xf32, #tpu.memory_space<vmem>>, vector<1x32x3xf32>
      %42 = vector.shape_cast %41 : vector<1x32x3xf32> to vector<32x3xf32>
      %43 = vector.shape_cast %40 : vector<32x3xf32> to vector<1x32x3xf32>
      tpu.vector_store %arg7[%c0_27, %c0_28, %c0_29], %43 {strides = array<i32>} : memref<1x32x3xf32, #tpu.memory_space<vmem>>, vector<1x32x3xf32>,
    } else {
    }
    return
  }
  func.func @transform_0(%arg0: i32, %arg1: i32) -> (i32, i32) {
    %c0_i32 = arith.constant 0 : i32
    %c0_i32_0 = arith.constant 0 : i32
    %c0_i32_1 = arith.constant 0 : i32
    return %c0_i32, %c0_i32_0 : i32, i32
  }
  func.func @transform_1(%arg0: i32, %arg1: i32) -> (i32, i32) {
    %c0_i32 = arith.constant 0 : i32
    %c0_i32_0 = arith.constant 0 : i32
    %c0_i32_1 = arith.constant 0 : i32
    return %c0_i32, %c0_i32_0 : i32, i32
  }
  func.func @transform_2(%arg0: i32, %arg1: i32) -> (i32, i32) {
    %c0_i32 = arith.constant 0 : i32
    %c0_i32_0 = arith.constant 0 : i32
    return %c0_i32, %arg1 : i32, i32
  }
  func.func @transform_3(%arg0: i32, %arg1: i32) -> (i32, i32, i32) {
    %c0_i32 = arith.constant 0 : i32
    %c0_i32_0 = arith.constant 0 : i32
    return %arg0, %c0_i32, %arg1 : i32, i32, i32
  }
  func.func @transform_4(%arg0: i32, %arg1: i32) -> (i32, i32, i32) {
    %c0_i32 = arith.constant 0 : i32
    %c0_i32_0 = arith.constant 0 : i32
    return %arg0, %c0_i32, %arg1 : i32, i32, i32
  }
  func.func @transform_5(%arg0: i32, %arg1: i32) -> (i32, i32, i32) {
    %c0_i32 = arith.constant 0 : i32
    %c0_i32_0 = arith.constant 0 : i32
    %c0_i32_1 = arith.constant 0 : i32
    return %arg0, %c0_i32, %c0_i32_0 : i32, i32, i32
  }
}

module attributes {stable_mosaic.version = 11 : i64} {
  func.func @norm_act_kernel(%arg0: i32, %arg1: i32, %arg2: memref<32x3xf32, #tpu.memory_space<vmem>>, %arg3: memref<1x32x128xbf16, #tpu.memory_space<vmem>>, %arg4: memref<1x32x128xf32, #tpu.memory_space<vmem>>) attributes {dimension_semantics = [#tpu.dimension_semantics<parallel>, #tpu.dimension_semantics<parallel>], iteration_bounds = array<i64: 2, 1>, scalar_prefetch = 0 : i64, scratch_operands = 0 : i64, tpu.core_type = #tpu.core_type<tc>, window_params = [{pipeline_mode = #tpu.pipeline_mode<synchronous>, transform_indices = @transform_0, window_bounds = array<i64: 32, 3>}, {transform_indices = @transform_1, window_bounds = array<i64: 1, 32, 128>}, {transform_indices = @transform_2, window_bounds = array<i64: 1, 32, 128>}]} {
    %c0 = arith.constant 0 : index
    %c0_0 = arith.constant 0 : index
    %c0_1 = arith.constant 0 : index
    %0 = vector.load %arg3[%c0, %c0_0, %c0_1] : memref<1x32x128xbf16, #tpu.memory_space<vmem>>, vector<1x32x128xbf16>
    %1 = vector.shape_cast %0 : vector<1x32x128xbf16> to vector<32x128xbf16>
    %2 = arith.extf %1 : vector<32x128xbf16> to vector<32x128xf32>
    %c16_i32 = arith.constant 16 : i32
    %3 = tpu.dynamic_rotate %2 by %c16_i32 dim 0 : vector<32x128xf32>, i32 -> vector<32x128xf32>
    %c0_2 = arith.constant 0 : index
    %c0_3 = arith.constant 0 : index
    %4 = vector.load %arg2[%c0_2, %c0_3] : memref<32x3xf32, #tpu.memory_space<vmem>>, vector<32x1xf32>
    %5 = vector.broadcast %4 : vector<32x1xf32> to vector<32x128xf32>
    %6 = arith.mulf %5, %2 : vector<32x128xf32>
    %c0_4 = arith.constant 0 : index
    %c1 = arith.constant 1 : index
    %7 = vector.load %arg2[%c0_4, %c1] : memref<32x3xf32, #tpu.memory_space<vmem>>, vector<32x1xf32>
    %8 = vector.broadcast %7 : vector<32x1xf32> to vector<32x128xf32>
    %9 = arith.mulf %8, %3 : vector<32x128xf32>
    %10 = arith.addf %6, %9 : vector<32x128xf32>
    %c0_5 = arith.constant 0 : index
    %c2 = arith.constant 2 : index
    %11 = vector.load %arg2[%c0_5, %c2] : memref<32x3xf32, #tpu.memory_space<vmem>>, vector<32x1xf32>
    %12 = vector.broadcast %11 : vector<32x1xf32> to vector<32x128xf32>
    %13 = arith.addf %10, %12 : vector<32x128xf32>
    %cst = arith.constant 0.000000e+00 : f32
    %14 = vector.broadcast %cst : f32 to vector<32x128xf32>
    %15 = arith.cmpf oge, %13, %14 : vector<32x128xf32>
    %cst_6 = arith.constant 1.000000e-01 : f32
    %16 = vector.broadcast %cst_6 : f32 to vector<32x128xf32>
    %17 = arith.mulf %16, %13 : vector<32x128xf32>
    %18 = arith.select %15, %13, %17 : vector<32x128xi1>, vector<32x128xf32>
    %c0_7 = arith.constant 0 : index
    %c0_8 = arith.constant 0 : index
    %c0_9 = arith.constant 0 : index
    %19 = vector.load %arg4[%c0_7, %c0_8, %c0_9] : memref<1x32x128xf32, #tpu.memory_space<vmem>>, vector<1x32x128xf32>
    %20 = vector.shape_cast %19 : vector<1x32x128xf32> to vector<32x128xf32>
    %21 = vector.shape_cast %18 : vector<32x128xf32> to vector<1x32x128xf32>
    tpu.vector_store %arg4[%c0_7, %c0_8, %c0_9], %21 {strides = array<i32>} : memref<1x32x128xf32, #tpu.memory_space<vmem>>, vector<1x32x128xf32>,
    return
  }
  func.func @transform_0(%arg0: i32, %arg1: i32) -> (i32, i32) {
    %c0_i32 = arith.constant 0 : i32
    %c0_i32_0 = arith.constant 0 : i32
    %c0_i32_1 = arith.constant 0 : i32
    return %c0_i32, %c0_i32_0 : i32, i32
  }
  func.func @transform_1(%arg0: i32, %arg1: i32) -> (i32, i32, i32) {
    %c0_i32 = arith.constant 0 : i32
    %c0_i32_0 = arith.constant 0 : i32
    return %arg0, %c0_i32, %arg1 : i32, i32, i32
  }
  func.func @transform_2(%arg0: i32, %arg1: i32) -> (i32, i32, i32) {
    %c0_i32 = arith.constant 0 : i32
    %c0_i32_0 = arith.constant 0 : i32
    return %arg0, %c0_i32, %arg1 : i32, i32, i32
  }
}

</mosaic_0001>

<llo_original>
// kernel: tile.43
$region0: #{tile.43}
  #allocation0 [shape = 's32[1]{0}', space=sflag, size = 0x4, scoped, tag = 'scoped memory for tile.43']
  %s0 = inlined_call_operand.vmem [shape: f32[4], index: 0, kind: input, shape index: {}]
  %s1 = inlined_call_operand.vmem [shape: f32[4,4], index: 1, kind: output, shape index: {}]
  // Predicated region
  $region2: #{tile.43} parent=0 // pred_check
    _
  $region3: #{tile.43} parent=0 // pred_check_branch
    %3 = sbr.rel (0) target = $region5
  $region4: #{tile.43} parent=0 // pred_region
    _
  $region5: #{tile.43} parent=0 // pred_fallthru
    _
  %v4 = vld [vmem:[%s0] ss:$0 sm:$0xff]
  %5 = vst [vmem:[%s1] sm:$0xf] %v4

// kernel: tile.44
$region0: #{tile.44}
  %s0 = inlined_call_operand.vmem [shape: f32[4,4], index: 0, kind: input, shape index: {}]
  %s1 = inlined_call_operand.vmem [shape: f32[16], index: 1, kind: output, shape index: {}]
  $region1: #{tile.44} parent=0
    #allocation0 [shape = 'u8[4096]{0}', space=vmem, size = 0x1000, scoped, tag = 'scoped mem for output reshape']
    #allocation1 [shape = 'u8[4096]{0}', space=vmem, size = 0x1000, scoped, tag = 'scoped mem for input reshape']
    %s3 = sshll.u32 1, 4
    %s4 = ssub.s32 %s3, 1
    %v5 = vld [vmem:[%s0] sm:%s4]
    %6 = vst [vmem:[#allocation1] sm:%s4] %v5
    %v7 = vld [vmem:[#allocation1] sm:$0x1]
    %vm8 = vcmask 31744
    %9 = vst.msk [vmem:[#allocation0] sm:$0x1] %vm8, %v7
    %s10 = scalar_lea.vmem [#allocation1], 3
    %v11 = vld [vmem:[%s10] sm:$0x1]
    %12 = vrot.lane.b32.xlu0 %v11, 12
    %v13 = vpop.permute.xlu0 %12
    %vm14 = vcmask 130144
    %15 = vst.msk [vmem:[#allocation0] sm:$0x1] %vm14, %v13
    %s16 = scalar_lea.vmem [#allocation1], 2
    %v17 = vld [vmem:[%s16] sm:$0x1]
    %18 = vrot.lane.b32.xlu0 %v17, 8
    %v19 = vpop.permute.xlu0 %18
    %vm20 = vcmask 97344
    %21 = vst.msk [vmem:[#allocation0] sm:$0x1] %vm20, %v19
    %s22 = scalar_lea.vmem [#allocation1], 1
    %v23 = vld [vmem:[%s22] sm:$0x1]
    %24 = vrot.lane.b32.xlu0 %v23, 4
    %v25 = vpop.permute.xlu0 %24
    %vm26 = vcmask 64544
    %27 = vst.msk [vmem:[#allocation0] sm:$0x1] %vm26, %v25
    %s29 = sshll.u32 1, 1
    %s30 = ssub.s32 %s29, 1
    %v32 = vld [vmem:[#allocation0] sm:%s30]
    %s33 = sshll.u32 1, 1
    %s34 = ssub.s32 %s33, 1
    %35 = vst [vmem:[%s1] sm:%s34] %v32

// kernel: decoder_forward.3
$region0: #{decoder_forward.3}
  #allocation0 [shape = 'u32[]', space=smem, size = 0x4, offset = 0x4, fixed_abs, tag = 'smem constant byte address 0x4 - core index']
  #allocation1 [shape = 'u32[144,128]{1,0:T(1,128)}', space=vmem, size = 0x12000, scoped, tag = 'internal scratch']
  %s0 = inlined_call_operand.vmem [shape: f32[32,3], index: 0, kind: input, shape index: {}]
  %s1 = inlined_call_operand.vmem [shape: bf16[2,32,128], index: 1, kind: input, shape index: {}]
  %s2 = inlined_call_operand.vmem [shape: f32[2,32,128], index: 2, kind: output, shape index: {}]
  %s3 = sld [smem:[#allocation0]]
  $region41: #{decoder_forward.3} parent=0
    _
  %s5 = ssub.s32 1, %s3
  %s6 = scalar_select 0, %s5, %s3
  loop: start=0, step=1, limit=4
  $region2: #{decoder_forward.3} parent=0 // loop_pre_header
    _
  $region3: #{decoder_forward.3} parent=0 // loop_header
    %s8 = sphi 0, %s12
    %p9 = scmp.ge.s32.totalorder %s8, 4
    %s15 = sphi 0, %s27
    %s16 = sphi 0, %s23
    %s17 = sphi 0, %s15
    %s18 = sphi 0, %s16
    %s19 = sphi 0, %s17
    %s20 = sphi 0, %s18
    %s28 = sphi 0, %s28
    %s30 = sphi 0, %s28
    %s31 = sphi 0, %s30
    %s45 = sphi 0, %s31
    %s53 = sphi 0, %s55
    %s56 = sphi 0, %s53
    %s57 = sphi 0, %s56
    %s73 = sphi 0, %s57
    %s81 = sphi 0, %s83
    %s84 = sphi 0, %s81
    %s85 = sphi 0, %s84
    %s101 = sphi 0, %s85
  $region4: #{decoder_forward.3} parent=0 // loop_header_branch
    %11 = sbr.rel (%p9) target = $region8
  $region5: #{decoder_forward.3} parent=0 // loop_body
    %s13 = ssub.s32 %s8, 1
    %s14 = ssub.s32 %s8, 2
    %s21 = sadd.s32 1, %s16
    %p22 = scmp.ge.s32.totalorder %s21, 1
    %s23 = scalar_select %p22, 0, %s21
    %s24 = sadd.s32 1, %s15
    %s25 = scalar_select %p22, %s24, %s15
    %p26 = scmp.ge.s32.totalorder %s25, 2
    %s27 = scalar_select %p26, 0, %s25
    %s29 = sadd.s32 %s28, 1
    %p32 = scmp.eq.s32.totalorder %s8, 1
    %p33 = scmp.ne.s32.totalorder %s28, %s30
    %p34 = scmp.eq.s32.totalorder %s8, 0
    %p35 = por %p33, %p34
    %p36 = scmp.ne.s32.totalorder %s28, %s30
    %p37 = scmp.eq.s32.totalorder %s13, 1
    %p38 = por %p36, %p37
    %p39 = scmp.ne.s32.totalorder %s30, %s31
    %p40 = scmp.eq.s32.totalorder %s13, 0
    %p41 = por %p39, %p40
    %p42 = scmp.ne.s32.totalorder %s30, %s31
    %p43 = scmp.eq.s32.totalorder %s14, 1
    %p44 = por %p42, %p43
    %p46 = scmp.ne.s32.totalorder %s31, %s45
    %p47 = scmp.eq.s32.totalorder %s14, 0
    %p48 = por %p46, %p47
    %s49 = ssub.s32 %s15, %s27
    %s50 = ssub.s32 %s16, %s23
    %s51 = sor.u32 %s49, %s50
    %p52 = scmp.eq.s32.totalorder %s51, 0
    %s54 = sadd.s32 %s53, 1
    %s55 = scalar_select %p52, %s53, %s54
    %p58 = pneg %p52
    %p59 = scmp.eq.s32.totalorder %s8, 1
    %p60 = por %p58, %p59
    %p61 = scmp.ne.s32.totalorder %s53, %s56
    %p62 = scmp.eq.s32.totalorder %s8, 0
    %p63 = por %p61, %p62
    %p64 = scmp.ne.s32.totalorder %s53, %s56
    %p65 = scmp.eq.s32.totalorder %s13, 1
    %p66 = por %p64, %p65
    %p67 = scmp.ne.s32.totalorder %s56, %s57
    %p68 = scmp.eq.s32.totalorder %s13, 0
    %p69 = por %p67, %p68
    %p70 = scmp.ne.s32.totalorder %s56, %s57
    %p71 = scmp.eq.s32.totalorder %s14, 1
    %p72 = por %p70, %p71
    %p74 = scmp.ne.s32.totalorder %s57, %s73
    %p75 = scmp.eq.s32.totalorder %s14, 0
    %p76 = por %p74, %p75
    %s77 = ssub.s32 %s15, %s27
    %s78 = ssub.s32 %s16, %s23
    %s79 = sor.u32 %s77, %s78
    %p80 = scmp.eq.s32.totalorder %s79, 0
    %s82 = sadd.s32 %s81, 1
    %s83 = scalar_select %p80, %s81, %s82
    %p86 = pneg %p80
    %p87 = scmp.eq.s32.totalorder %s8, 1
    %p88 = por %p86, %p87
    %p89 = scmp.ne.s32.totalorder %s81, %s84
    %p90 = scmp.eq.s32.totalorder %s8, 0
    %p91 = por %p89, %p90
    %p92 = scmp.ne.s32.totalorder %s81, %s84
    %p93 = scmp.eq.s32.totalorder %s13, 1
    %p94 = por %p92, %p93
    %p95 = scmp.ne.s32.totalorder %s84, %s85
    %p96 = scmp.eq.s32.totalorder %s13, 0
    %p97 = por %p95, %p96
    %p98 = scmp.ne.s32.totalorder %s84, %s85
    %p99 = scmp.eq.s32.totalorder %s14, 1
    %p100 = por %p98, %p99
    %p102 = scmp.ne.s32.totalorder %s85, %s101
    %p103 = scmp.eq.s32.totalorder %s14, 0
    %p104 = por %p102, %p103
    %p105 = scmp.le.s32.totalorder 1, %s8
    %p106 = scmp.lt.s32.totalorder %s8, 3
    %p107 = pnand %p105, %p106
    %p108 = pneg %p107
    // Predicated region
    $region9: #{decoder_forward.3} parent=5 // pred_check
      _
    $region10: #{decoder_forward.3} parent=5 // pred_check_branch
      %110 = sbr.rel (%p107) target = $region12
    $region11: #{decoder_forward.3} parent=5 // pred_region
      %s111 = ssub.s32 %s8, 1
      // Predicated region
      $region13: #{decoder_forward.3} parent=11 // pred_check
        %p112 = pneg %p41
      $region14: #{decoder_forward.3} parent=11 // pred_check_branch
        %114 = sbr.rel (%p112) target = $region16
      $region15: #{decoder_forward.3} parent=11 // pred_region
        _
      $region16: #{decoder_forward.3} parent=11 // pred_fallthru
        _
    $region12: #{decoder_forward.3} parent=5 // pred_fallthru
      _
    %p115 = scmp.lt.s32.totalorder %s8, 2
    // Predicated region
    $region17: #{decoder_forward.3} parent=5 // pred_check
      %p116 = pneg %p115
    $region18: #{decoder_forward.3} parent=5 // pred_check_branch
      %118 = sbr.rel (%p116) target = $region20
    $region19: #{decoder_forward.3} parent=5 // pred_region
      // Predicated region
      $region21: #{decoder_forward.3} parent=19 // pred_check
        %p119 = pneg %p63
      $region22: #{decoder_forward.3} parent=19 // pred_check_branch
        %121 = sbr.rel (%p119) target = $region24
      $region23: #{decoder_forward.3} parent=19 // pred_region
        %p122 = scmp.lt.s32.totalorder %s15, 1
        %s123 = scalar_select %p122, %s15, 1
        %p124 = scmp.lt.s32.totalorder %s16, 0
        %s125 = scalar_select %p124, %s16, 0
        %s126 = smul.addr %s123, 4
        %s127 = sadd.s32 %s125, %s126
        %s128 = smul.addr %s127, 4
        %s129 = scalar_lea.vmem %s1, %s128
      $region24: #{decoder_forward.3} parent=19 // pred_fallthru
        _
    $region20: #{decoder_forward.3} parent=5 // pred_fallthru
      _
    %p130 = scmp.le.s32.totalorder 1, %s8
    %p131 = scmp.lt.s32.totalorder %s8, 3
    %p132 = pnand %p130, %p131
    %p133 = pneg %p132
    // Predicated region
    $region25: #{decoder_forward.3} parent=5 // pred_check
      _
    $region26: #{decoder_forward.3} parent=5 // pred_check_branch
      %135 = sbr.rel (%p132) target = $region28
    $region27: #{decoder_forward.3} parent=5 // pred_region
      %s136 = ssub.s32 %s8, 1
      %p137 = pneg %p41
      %p138 = pneg %p38
      %p139 = scmp.lt.s32.totalorder %s17, 1
      %s140 = scalar_select %p139, %s17, 1
      %p141 = scmp.lt.s32.totalorder %s18, 0
      %s142 = scalar_select %p141, %s18, 0
      %s143 = smul.addr %s140, 4
      %s144 = sadd.s32 %s142, %s143
      %s145 = smul.addr %s144, 4
      %s146 = scalar_lea.vmem %s1, %s145
      %p147 = pneg %p69
      %p148 = pneg %p66
      %p149 = pneg %p97
      %p150 = pneg %p94
      %p151 = scmp.lt.s32.totalorder %s17, 1
      %s152 = scalar_select %p151, %s17, 1
      %p153 = scmp.lt.s32.totalorder %s18, 0
      %s154 = scalar_select %p153, %s18, 0
      %s155 = smul.addr %s152, 4
      %s156 = sadd.s32 %s154, %s155
      %s157 = smul.addr %s156, 8
      %s158 = scalar_lea.vmem %s2, %s157
      %p159 = scmp.lt.s32.totalorder %s17, 1
      %s160 = scalar_select %p159, %s17, 1
      %p161 = scmp.lt.s32.totalorder %s18, 0
      %s162 = scalar_select %p161, %s18, 0
      %s163 = smul.addr %s160, 4
      %s164 = sadd.s32 %s162, %s163
      %s165 = smul.addr %s164, 4
      %s166 = scalar_lea.vmem %s1, %s165
      %p167 = scmp.lt.s32.totalorder %s17, 1
      %s168 = scalar_select %p167, %s17, 1
      %p169 = scmp.lt.s32.totalorder %s18, 0
      %s170 = scalar_select %p169, %s18, 0
      %s171 = smul.addr %s168, 4
      %s172 = sadd.s32 %s170, %s171
      %s173 = smul.addr %s172, 8
      %s174 = scalar_lea.vmem %s2, %s173
      %v175 = vld [vmem:[%s166] sm:$0xf]
      %v176 = vld [vmem:[%s166 + $0x4] sm:$0xf]
      %v177 = vld [vmem:[%s166 + $0x8] sm:$0xf]
      %v178 = vld [vmem:[%s166 + $0xc] sm:$0xf]
      %v179 = vunpack.c.l.bf16 %v175
      %v180 = vunpack.c.l.bf16 %v176
      %v181 = vunpack.c.l.bf16 %v177
      %v182 = vunpack.c.l.bf16 %v178
      %v183 = vld [vmem:[%s0] sm:$0xff]
      %v184 = vld [vmem:[%s0 + $0x8] sm:$0xff]
      %v185 = vld [vmem:[%s0 + $0x10] sm:$0xff]
      %v186 = vld [vmem:[%s0 + $0x18] sm:$0xff]
      %188 = vset.pattern.permute.xlu0 0
      %189 = vperm.xlu0 %188, %v183
      %v190 = vpop.permute.xlu0 %189
      %193 = vset.pattern.permute.xlu0 0
      %194 = vperm.xlu0 %193, %v184
      %v195 = vpop.permute.xlu0 %194
      %198 = vset.pattern.permute.xlu0 0
      %199 = vperm.xlu0 %198, %v185
      %v200 = vpop.permute.xlu0 %199
      %203 = vset.pattern.permute.xlu0 0
      %204 = vperm.xlu0 %203, %v186
      %v205 = vpop.permute.xlu0 %204
      %v207 = vmul.f32 %v190, %v179
      %v208 = vmul.f32 %v195, %v180
      %v209 = vmul.f32 %v200, %v181
      %v210 = vmul.f32 %v205, %v182
      %211 = vset.pattern.permute.xlu0 1
      %212 = vperm.xlu0 %211, %v183
      %v213 = vpop.permute.xlu0 %212
      %215 = vset.pattern.permute.xlu0 1
      %216 = vperm.xlu0 %215, %v184
      %v217 = vpop.permute.xlu0 %216
      %219 = vset.pattern.permute.xlu0 1
      %220 = vperm.xlu0 %219, %v185
      %v221 = vpop.permute.xlu0 %220
      %223 = vset.pattern.permute.xlu0 1
      %224 = vperm.xlu0 %223, %v186
      %v225 = vpop.permute.xlu0 %224
      %v227 = vmul.f32 %v213, %v181
      %v228 = vmul.f32 %v217, %v182
      %v229 = vmul.f32 %v221, %v179
      %v230 = vmul.f32 %v225, %v180
      %v231 = vadd.f32 %v207, %v227
      %v232 = vadd.f32 %v208, %v228
      %v233 = vadd.f32 %v209, %v229
      %v234 = vadd.f32 %v210, %v230
      %235 = vset.pattern.permute.xlu0 2
      %236 = vperm.xlu0 %235, %v183
      %v237 = vpop.permute.xlu0 %236
      %239 = vset.pattern.permute.xlu0 2
      %240 = vperm.xlu0 %239, %v184
      %v241 = vpop.permute.xlu0 %240
      %243 = vset.pattern.permute.xlu0 2
      %244 = vperm.xlu0 %243, %v185
      %v245 = vpop.permute.xlu0 %244
      %247 = vset.pattern.permute.xlu0 2
      %248 = vperm.xlu0 %247, %v186
      %v249 = vpop.permute.xlu0 %248
      %v251 = vadd.f32 %v231, %v237
      %v252 = vadd.f32 %v232, %v241
      %v253 = vadd.f32 %v233, %v245
      %v254 = vadd.f32 %v234, %v249
      %vm255 = vcmp.ge.f32.partialorder %v251, 0.0
      %vm256 = vcmp.ge.f32.partialorder %v252, 0.0
      %vm257 = vcmp.ge.f32.partialorder %v253, 0.0
      %vm258 = vcmp.ge.f32.partialorder %v254, 0.0
      %v259 = vmul.f32 %v251, 0.1
      %v260 = vmul.f32 %v252, 0.1
      %v261 = vmul.f32 %v253, 0.1
      %v262 = vmul.f32 %v254, 0.1
      %v263 = vsel %vm255, %v251, %v259
      %v264 = vsel %vm256, %v252, %v260
      %v265 = vsel %vm257, %v253, %v261
      %v266 = vsel %vm258, %v254, %v262
      %267 = vst [vmem:[%s174] sm:$0xff] %v263
      %268 = vst [vmem:[%s174 + $0x8] sm:$0xff] %v264
      %269 = vst [vmem:[%s174 + $0x10] sm:$0xff] %v265
      %270 = vst [vmem:[%s174 + $0x18] sm:$0xff] %v266
      %p271 = scmp.lt.s32.totalorder %s17, 1
      %s272 = scalar_select %p271, %s17, 1
      %p273 = scmp.lt.s32.totalorder %s18, 0
      %s274 = scalar_select %p273, %s18, 0
      %s275 = smul.addr %s272, 4
      %s276 = sadd.s32 %s274, %s275
      %s277 = smul.addr %s276, 8
      %s278 = scalar_lea.vmem %s2, %s277
      // Predicated region
      $region29: #{decoder_forward.3} parent=27 // pred_check
        %p279 = pneg %p94
      $region30: #{decoder_forward.3} parent=27 // pred_check_branch
        %281 = sbr.rel (%p279) target = $region32
      $region31: #{decoder_forward.3} parent=27 // pred_region
        _
      $region32: #{decoder_forward.3} parent=27 // pred_fallthru
        _
    $region28: #{decoder_forward.3} parent=5 // pred_fallthru
      _
    %p282 = scmp.le.s32.totalorder 2, %s8
    // Predicated region
    $region33: #{decoder_forward.3} parent=5 // pred_check
      %p283 = pneg %p282
    $region34: #{decoder_forward.3} parent=5 // pred_check_branch
      %285 = sbr.rel (%p283) target = $region36
    $region35: #{decoder_forward.3} parent=5 // pred_region
      %s286 = ssub.s32 %s8, 2
      // Predicated region
      $region37: #{decoder_forward.3} parent=35 // pred_check
        %p287 = pneg %p100
      $region38: #{decoder_forward.3} parent=35 // pred_check_branch
        %289 = sbr.rel (%p287) target = $region40
      $region39: #{decoder_forward.3} parent=35 // pred_region
        %p290 = scmp.lt.s32.totalorder %s19, 1
        %s291 = scalar_select %p290, %s19, 1
        %p292 = scmp.lt.s32.totalorder %s20, 0
        %s293 = scalar_select %p292, %s20, 0
        %s294 = smul.addr %s291, 4
        %s295 = sadd.s32 %s293, %s294
        %s296 = smul.addr %s295, 8
        %s297 = scalar_lea.vmem %s2, %s296
      $region40: #{decoder_forward.3} parent=35 // pred_fallthru
        _
    $region36: #{decoder_forward.3} parent=5 // pred_fallthru
      _
  $region6: #{decoder_forward.3} parent=0 // loop_footer
    %s12 = sadd.s32 1, %s8
  $region7: #{decoder_forward.3} parent=0 // loop_footer_branch
    %7 = sbr.rel target = $region3
  $region8: #{decoder_forward.3} parent=0 // loop_exit
    _

// kernel: decoder_forward.2
$region0: #{decoder_forward.2}
  #allocation0 [shape = 'u32[]', space=smem, size = 0x4, offset = 0x4, fixed_abs, tag = 'smem constant byte address 0x4 - core index']
  #allocation1 [shape = 'u32[144,128]{1,0:T(1,128)}', space=vmem, size = 0x12000, scoped, tag = 'internal scratch']
  #allocation2 [shape = 'f32[32,3]{1,0:T(8,128)}', space=vmem, size = 0x4000, scoped, tag = 'scratch operand']
  %s0 = inlined_call_operand.vmem [shape: bf16[32,64], index: 0, kind: input, shape index: {}]
  %s1 = inlined_call_operand.vmem [shape: s32[32,2], index: 1, kind: input, shape index: {}]
  %s2 = inlined_call_operand.vmem [shape: s32[2,128], index: 2, kind: input, shape index: {}]
  %s3 = inlined_call_operand.vmem [shape: bf16[2,64,128], index: 3, kind: input, shape index: {}]
  %s4 = inlined_call_operand.vmem [shape: bf16[2,32,128], index: 4, kind: output, shape index: {0}]
  %s5 = inlined_call_operand.vmem [shape: f32[2,32,3], index: 5, kind: output, shape index: {1}]
  %6 = xla_tuple %s4, %s5
  %s7 = sld [smem:[#allocation0]]
  $region65: #{decoder_forward.2} parent=0
    _
  %s9 = ssub.s32 1, %s7
  %s10 = scalar_select 0, %s9, %s7
  loop: start=0, step=1, limit=4
  $region2: #{decoder_forward.2} parent=0 // loop_pre_header
    _
  $region3: #{decoder_forward.2} parent=0 // loop_header
    %s12 = sphi 0, %s16
    %p13 = scmp.ge.s32.totalorder %s12, 4
    %s19 = sphi 0, %s31
    %s20 = sphi 0, %s27
    %s21 = sphi 0, %s19
    %s22 = sphi 0, %s20
    %s23 = sphi 0, %s21
    %s24 = sphi 0, %s22
    %s32 = sphi 0, %s32
    %s34 = sphi 0, %s32
    %s35 = sphi 0, %s34
    %s49 = sphi 0, %s35
    %s53 = sphi 0, %s53
    %s55 = sphi 0, %s53
    %s56 = sphi 0, %s55
    %s70 = sphi 0, %s56
    %s76 = sphi 0, %s78
    %s79 = sphi 0, %s76
    %s80 = sphi 0, %s79
    %s96 = sphi 0, %s80
    %s104 = sphi 0, %s106
    %s107 = sphi 0, %s104
    %s108 = sphi 0, %s107
    %s124 = sphi 0, %s108
    %s132 = sphi 0, %s134
    %s135 = sphi 0, %s132
    %s136 = sphi 0, %s135
    %s152 = sphi 0, %s136
    %s158 = sphi 0, %s160
    %s161 = sphi 0, %s158
    %s162 = sphi 0, %s161
    %s178 = sphi 0, %s162
  $region4: #{decoder_forward.2} parent=0 // loop_header_branch
    %15 = sbr.rel (%p13) target = $region8
  $region5: #{decoder_forward.2} parent=0 // loop_body
    %s17 = ssub.s32 %s12, 1
    %s18 = ssub.s32 %s12, 2
    %s25 = sadd.s32 1, %s20
    %p26 = scmp.ge.s32.totalorder %s25, 1
    %s27 = scalar_select %p26, 0, %s25
    %s28 = sadd.s32 1, %s19
    %s29 = scalar_select %p26, %s28, %s19
    %p30 = scmp.ge.s32.totalorder %s29, 2
    %s31 = scalar_select %p30, 0, %s29
    %s33 = sadd.s32 %s32, 1
    %p36 = scmp.eq.s32.totalorder %s12, 1
    %p37 = scmp.ne.s32.totalorder %s32, %s34
    %p38 = scmp.eq.s32.totalorder %s12, 0
    %p39 = por %p37, %p38
    %p40 = scmp.ne.s32.totalorder %s32, %s34
    %p41 = scmp.eq.s32.totalorder %s17, 1
    %p42 = por %p40, %p41
    %p43 = scmp.ne.s32.totalorder %s34, %s35
    %p44 = scmp.eq.s32.totalorder %s17, 0
    %p45 = por %p43, %p44
    %p46 = scmp.ne.s32.totalorder %s34, %s35
    %p47 = scmp.eq.s32.totalorder %s18, 1
    %p48 = por %p46, %p47
    %p50 = scmp.ne.s32.totalorder %s35, %s49
    %p51 = scmp.eq.s32.totalorder %s18, 0
    %p52 = por %p50, %p51
    %s54 = sadd.s32 %s53, 1
    %p57 = scmp.eq.s32.totalorder %s12, 1
    %p58 = scmp.ne.s32.totalorder %s53, %s55
    %p59 = scmp.eq.s32.totalorder %s12, 0
    %p60 = por %p58, %p59
    %p61 = scmp.ne.s32.totalorder %s53, %s55
    %p62 = scmp.eq.s32.totalorder %s17, 1
    %p63 = por %p61, %p62
    %p64 = scmp.ne.s32.totalorder %s55, %s56
    %p65 = scmp.eq.s32.totalorder %s17, 0
    %p66 = por %p64, %p65
    %p67 = scmp.ne.s32.totalorder %s55, %s56
    %p68 = scmp.eq.s32.totalorder %s18, 1
    %p69 = por %p67, %p68
    %p71 = scmp.ne.s32.totalorder %s56, %s70
    %p72 = scmp.eq.s32.totalorder %s18, 0
    %p73 = por %p71, %p72
    %s74 = ssub.s32 %s20, %s27
    %p75 = scmp.eq.s32.totalorder %s74, 0
    %s77 = sadd.s32 %s76, 1
    %s78 = scalar_select %p75, %s76, %s77
    %p81 = pneg %p75
    %p82 = scmp.eq.s32.totalorder %s12, 1
    %p83 = por %p81, %p82
    %p84 = scmp.ne.s32.totalorder %s76, %s79
    %p85 = scmp.eq.s32.totalorder %s12, 0
    %p86 = por %p84, %p85
    %p87 = scmp.ne.s32.totalorder %s76, %s79
    %p88 = scmp.eq.s32.totalorder %s17, 1
    %p89 = por %p87, %p88
    %p90 = scmp.ne.s32.totalorder %s79, %s80
    %p91 = scmp.eq.s32.totalorder %s17, 0
    %p92 = por %p90, %p91
    %p93 = scmp.ne.s32.totalorder %s79, %s80
    %p94 = scmp.eq.s32.totalorder %s18, 1
    %p95 = por %p93, %p94
    %p97 = scmp.ne.s32.totalorder %s80, %s96
    %p98 = scmp.eq.s32.totalorder %s18, 0
    %p99 = por %p97, %p98
    %s100 = ssub.s32 %s19, %s31
    %s101 = ssub.s32 %s20, %s27
    %s102 = sor.u32 %s100, %s101
    %p103 = scmp.eq.s32.totalorder %s102, 0
    %s105 = sadd.s32 %s104, 1
    %s106 = scalar_select %p103, %s104, %s105
    %p109 = pneg %p103
    %p110 = scmp.eq.s32.totalorder %s12, 1
    %p111 = por %p109, %p110
    %p112 = scmp.ne.s32.totalorder %s104, %s107
    %p113 = scmp.eq.s32.totalorder %s12, 0
    %p114 = por %p112, %p113
    %p115 = scmp.ne.s32.totalorder %s104, %s107
    %p116 = scmp.eq.s32.totalorder %s17, 1
    %p117 = por %p115, %p116
    %p118 = scmp.ne.s32.totalorder %s107, %s108
    %p119 = scmp.eq.s32.totalorder %s17, 0
    %p120 = por %p118, %p119
    %p121 = scmp.ne.s32.totalorder %s107, %s108
    %p122 = scmp.eq.s32.totalorder %s18, 1
    %p123 = por %p121, %p122
    %p125 = scmp.ne.s32.totalorder %s108, %s124
    %p126 = scmp.eq.s32.totalorder %s18, 0
    %p127 = por %p125, %p126
    %s128 = ssub.s32 %s19, %s31
    %s129 = ssub.s32 %s20, %s27
    %s130 = sor.u32 %s128, %s129
    %p131 = scmp.eq.s32.totalorder %s130, 0
    %s133 = sadd.s32 %s132, 1
    %s134 = scalar_select %p131, %s132, %s133
    %p137 = pneg %p131
    %p138 = scmp.eq.s32.totalorder %s12, 1
    %p139 = por %p137, %p138
    %p140 = scmp.ne.s32.totalorder %s132, %s135
    %p141 = scmp.eq.s32.totalorder %s12, 0
    %p142 = por %p140, %p141
    %p143 = scmp.ne.s32.totalorder %s132, %s135
    %p144 = scmp.eq.s32.totalorder %s17, 1
    %p145 = por %p143, %p144
    %p146 = scmp.ne.s32.totalorder %s135, %s136
    %p147 = scmp.eq.s32.totalorder %s17, 0
    %p148 = por %p146, %p147
    %p149 = scmp.ne.s32.totalorder %s135, %s136
    %p150 = scmp.eq.s32.totalorder %s18, 1
    %p151 = por %p149, %p150
    %p153 = scmp.ne.s32.totalorder %s136, %s152
    %p154 = scmp.eq.s32.totalorder %s18, 0
    %p155 = por %p153, %p154
    %s156 = ssub.s32 %s19, %s31
    %p157 = scmp.eq.s32.totalorder %s156, 0
    %s159 = sadd.s32 %s158, 1
    %s160 = scalar_select %p157, %s158, %s159
    %p163 = pneg %p157
    %p164 = scmp.eq.s32.totalorder %s12, 1
    %p165 = por %p163, %p164
    %p166 = scmp.ne.s32.totalorder %s158, %s161
    %p167 = scmp.eq.s32.totalorder %s12, 0
    %p168 = por %p166, %p167
    %p169 = scmp.ne.s32.totalorder %s158, %s161
    %p170 = scmp.eq.s32.totalorder %s17, 1
    %p171 = por %p169, %p170
    %p172 = scmp.ne.s32.totalorder %s161, %s162
    %p173 = scmp.eq.s32.totalorder %s17, 0
    %p174 = por %p172, %p173
    %p175 = scmp.ne.s32.totalorder %s161, %s162
    %p176 = scmp.eq.s32.totalorder %s18, 1
    %p177 = por %p175, %p176
    %p179 = scmp.ne.s32.totalorder %s162, %s178
    %p180 = scmp.eq.s32.totalorder %s18, 0
    %p181 = por %p179, %p180
    %p182 = scmp.le.s32.totalorder 1, %s12
    %p183 = scmp.lt.s32.totalorder %s12, 3
    %p184 = pnand %p182, %p183
    %p185 = pneg %p184
    // Predicated region
    $region9: #{decoder_forward.2} parent=5 // pred_check
      _
    $region10: #{decoder_forward.2} parent=5 // pred_check_branch
      %187 = sbr.rel (%p184) target = $region12
    $region11: #{decoder_forward.2} parent=5 // pred_region
      %s188 = ssub.s32 %s12, 1
      // Predicated region
      $region13: #{decoder_forward.2} parent=11 // pred_check
        %p189 = pneg %p45
      $region14: #{decoder_forward.2} parent=11 // pred_check_branch
        %191 = sbr.rel (%p189) target = $region16
      $region15: #{decoder_forward.2} parent=11 // pred_region
        _
      $region16: #{decoder_forward.2} parent=11 // pred_fallthru
        _
      // Predicated region
      $region17: #{decoder_forward.2} parent=11 // pred_check
        %p192 = pneg %p66
      $region18: #{decoder_forward.2} parent=11 // pred_check_branch
        %194 = sbr.rel (%p192) target = $region20
      $region19: #{decoder_forward.2} parent=11 // pred_region
        _
      $region20: #{decoder_forward.2} parent=11 // pred_fallthru
        _
      // Predicated region
      $region21: #{decoder_forward.2} parent=11 // pred_check
        %p195 = pneg %p92
      $region22: #{decoder_forward.2} parent=11 // pred_check_branch
        %197 = sbr.rel (%p195) target = $region24
      $region23: #{decoder_forward.2} parent=11 // pred_region
        %p198 = scmp.lt.s32.totalorder %s22, 0
        %s199 = scalar_select %p198, %s22, 0
        %s200 = smul.addr %s199, 2
        %s201 = scalar_lea.vmem %s2, %s200
      $region24: #{decoder_forward.2} parent=11 // pred_fallthru
        _
    $region12: #{decoder_forward.2} parent=5 // pred_fallthru
      _
    %p202 = scmp.lt.s32.totalorder %s12, 2
    // Predicated region
    $region25: #{decoder_forward.2} parent=5 // pred_check
      %p203 = pneg %p202
    $region26: #{decoder_forward.2} parent=5 // pred_check_branch
      %205 = sbr.rel (%p203) target = $region28
    $region27: #{decoder_forward.2} parent=5 // pred_region
      // Predicated region
      $region29: #{decoder_forward.2} parent=27 // pred_check
        %p206 = pneg %p114
      $region30: #{decoder_forward.2} parent=27 // pred_check_branch
        %208 = sbr.rel (%p206) target = $region32
      $region31: #{decoder_forward.2} parent=27 // pred_region
        %p209 = scmp.lt.s32.totalorder %s19, 1
        %s210 = scalar_select %p209, %s19, 1
        %p211 = scmp.lt.s32.totalorder %s20, 0
        %s212 = scalar_select %p211, %s20, 0
        %s213 = smul.addr %s210, 8
        %s214 = sadd.s32 %s212, %s213
        %s215 = smul.addr %s214, 4
        %s216 = scalar_lea.vmem %s3, %s215
      $region32: #{decoder_forward.2} parent=27 // pred_fallthru
        _
    $region28: #{decoder_forward.2} parent=5 // pred_fallthru
      _
    %p217 = scmp.le.s32.totalorder 1, %s12
    %p218 = scmp.lt.s32.totalorder %s12, 3
    %p219 = pnand %p217, %p218
    %p220 = pneg %p219
    // Predicated region
    $region33: #{decoder_forward.2} parent=5 // pred_check
      _
    $region34: #{decoder_forward.2} parent=5 // pred_check_branch
      %222 = sbr.rel (%p219) target = $region36
    $region35: #{decoder_forward.2} parent=5 // pred_region
      %s223 = ssub.s32 %s12, 1
      %p224 = pneg %p45
      %p225 = pneg %p42
      %p226 = pneg %p66
      %p227 = pneg %p63
      %p228 = scmp.lt.s32.totalorder %s22, 0
      %s229 = scalar_select %p228, %s22, 0
      %s230 = smul.addr %s229, 2
      %s231 = scalar_lea.vmem %s2, %s230
      %p232 = pneg %p92
      %p233 = pneg %p89
      %p234 = scmp.lt.s32.totalorder %s21, 1
      %s235 = scalar_select %p234, %s21, 1
      %p236 = scmp.lt.s32.totalorder %s22, 0
      %s237 = scalar_select %p236, %s22, 0
      %s238 = smul.addr %s235, 8
      %s239 = sadd.s32 %s237, %s238
      %s240 = smul.addr %s239, 4
      %s241 = scalar_lea.vmem %s3, %s240
      %p242 = pneg %p120
      %p243 = pneg %p117
      %p244 = pneg %p148
      %p245 = pneg %p145
      %p246 = scmp.lt.s32.totalorder %s21, 1
      %s247 = scalar_select %p246, %s21, 1
      %p248 = scmp.lt.s32.totalorder %s22, 0
      %s249 = scalar_select %p248, %s22, 0
      %s250 = smul.addr %s247, 4
      %s251 = sadd.s32 %s249, %s250
      %s252 = smul.addr %s251, 4
      %s253 = scalar_lea.vmem %s4, %s252
      %p254 = pneg %p174
      %p255 = pneg %p171
      %p256 = scmp.lt.s32.totalorder %s21, 1
      %s257 = scalar_select %p256, %s21, 1
      %s258 = smul.addr %s257, 4
      %s259 = smul.addr %s258, 8
      %s260 = scalar_lea.vmem %s5, %s259
      %p261 = scmp.lt.s32.totalorder %s22, 0
      %s262 = scalar_select %p261, %s22, 0
      %s263 = smul.addr %s262, 2
      %s264 = scalar_lea.vmem %s2, %s263
      %p265 = scmp.lt.s32.totalorder %s21, 1
      %s266 = scalar_select %p265, %s21, 1
      %p267 = scmp.lt.s32.totalorder %s22, 0
      %s268 = scalar_select %p267, %s22, 0
      %s269 = smul.addr %s266, 8
      %s270 = sadd.s32 %s268, %s269
      %s271 = smul.addr %s270, 4
      %s272 = scalar_lea.vmem %s3, %s271
      %p273 = scmp.lt.s32.totalorder %s21, 1
      %s274 = scalar_select %p273, %s21, 1
      %p275 = scmp.lt.s32.totalorder %s22, 0
      %s276 = scalar_select %p275, %s22, 0
      %s277 = smul.addr %s274, 4
      %s278 = sadd.s32 %s276, %s277
      %s279 = smul.addr %s278, 4
      %s280 = scalar_lea.vmem %s4, %s279
      %p281 = scmp.lt.s32.totalorder %s21, 1
      %s282 = scalar_select %p281, %s21, 1
      %s283 = smul.addr %s282, 4
      %s284 = smul.addr %s283, 8
      %s285 = scalar_lea.vmem %s5, %s284
      %p287 = scmp.eq.s32.totalorder %s22, 0
      // Predicated region
      $region37: #{decoder_forward.2} parent=35 // pred_check
        %p288 = pneg %p287
      $region38: #{decoder_forward.2} parent=35 // pred_check_branch
        %290 = sbr.rel (%p288) target = $region40
      $region39: #{decoder_forward.2} parent=35 // pred_region
        %vm291 = vcmask 23552
        %292 = vst.msk [vmem:[#allocation2] sm:$0xff] %vm291, 0.0
        %293 = vst.msk [vmem:[#allocation2 + $0x8] sm:$0xff] %vm291, 0.0
        %294 = vst.msk [vmem:[#allocation2 + $0x10] sm:$0xff] %vm291, 0.0
        %295 = vst.msk [vmem:[#allocation2 + $0x18] sm:$0xff] %vm291, 0.0
      $region40: #{decoder_forward.2} parent=35 // pred_fallthru
        _
      %v296 = vld [vmem:[%s0] sm:$0xf]
      %v297 = vld [vmem:[%s0 + $0x4] sm:$0xf]
      %v298 = vld [vmem:[%s0 + $0x8] sm:$0xf]
      %v299 = vld [vmem:[%s0 + $0xc] sm:$0xf]
      %v300 = vld [vmem:[%s272] sm:$0xf]
      %v301 = vld [vmem:[%s272 + $0x4] sm:$0xf]
      %v302 = vld [vmem:[%s272 + $0x8] sm:$0xf]
      %v303 = vld [vmem:[%s272 + $0xc] sm:$0xf]
      %v304 = vld [vmem:[%s272 + $0x10] sm:$0xf]
      %v305 = vld [vmem:[%s272 + $0x14] sm:$0xf]
      %v306 = vld [vmem:[%s272 + $0x18] sm:$0xf]
      %v307 = vld [vmem:[%s272 + $0x1c] sm:$0xf]
      %v312 = vunpack.c.l.b16 %v296
      %v313 = vunpack.c.l.b16 %v297
      %v314 = vunpack.c.l.b16 %v298
      %v315 = vunpack.c.l.b16 %v299
      %v316 = vpack.c.b16 %v313, %v312
      %v317 = vpack.c.b16 %v315, %v314
      %v326 = vunpack.c.l.b16 %v300
      %v327 = vunpack.c.l.b16 %v301
      %v328 = vunpack.c.l.b16 %v302
      %v329 = vunpack.c.l.b16 %v303
      %v330 = vunpack.c.l.b16 %v304
      %v331 = vunpack.c.l.b16 %v305
      %v332 = vunpack.c.l.b16 %v306
      %v333 = vunpack.c.l.b16 %v307
      %v334 = vpack.c.b16 %v327, %v326
      %v335 = vpack.c.b16 %v329, %v328
      %v336 = vpack.c.b16 %v331, %v330
      %v337 = vpack.c.b16 %v333, %v332
      %vm342 = vcmask 523264
      %v344 = vsel %vm342, %v316, 0
      %v347 = vsel %vm342, %v317, 0
      %349 = vmatprep.subr.bf16.mxu0 0
      %350 = vmatpush1.bf16.msra.mxu0 0
      %351 = vmatprep.subr.bf16.mxu0 0
      %352 = vmatpush1.bf16.msra.mxu0 0
      %353 = vmatprep.subr.bf16.mxu0 0
      %354 = vmatpush1.bf16.msra.mxu0 0
      %355 = vmatprep.subr.bf16.mxu0 0
      %356 = vmatpush1.bf16.msra.mxu0 0
      %357 = vmatprep.subr.bf16.mxu0 0
      %358 = vmatpush1.bf16.msra.mxu0 %v337
      %359 = vmatprep.subr.bf16.mxu0 0
      %360 = vmatpush1.bf16.msra.mxu0 %v336
      %361 = vmatprep.subr.bf16.mxu0 0
      %362 = vmatpush1.bf16.msra.mxu0 %v335
      %363 = vmatprep.subr.bf16.mxu0 0
      %364 = vmatpush1.bf16.msra.mxu0 %v334
      %365 = vmatprep.subr.bf16.mxu0 0
      %366 = vmatpush2.bf16.msra.mxu0 0
      %367 = vmatprep.subr.bf16.mxu0 0
      %368 = vmatpush2.bf16.msra.mxu0 0
      %369 = vmatprep.subr.bf16.mxu0 0
      %370 = vmatpush2.bf16.msra.mxu0 0
      %371 = vmatprep.subr.bf16.mxu0 0
      %372 = vmatpush2.bf16.msra.mxu0 0
      %373 = vmatprep.subr.bf16.mxu0 0
      %374 = vmatpush2.bf16.msra.mxu0 0
      %375 = vmatprep.subr.bf16.mxu0 0
      %376 = vmatpush2.bf16.msra.mxu0 0
      %377 = vmatprep.subr.bf16.mxu0 0
      %378 = vmatpush2.bf16.msra.mxu0 0
      %379 = vmatprep.subr.bf16.mxu0 0
      %380 = vmatpush2.bf16.msra.mxu0 0
      %381 = vmatprep.mubr.bf16.mxu0 0
      %382 = vmatmul.mubr.bf16.gmra.mxu0 %v344
      %v383 = vpop.f32.mrf.mxu0
      %v384 = vadd.f32 0.0, %v383
      %v385 = vpop.f32.mrf.mxu0
      %v386 = vpop.f32.mrf.mxu0
      %v387 = vadd.f32 0.0, %v386
      %v388 = vpop.f32.mrf.mxu0
      %389 = vmatprep.mubr.bf16.mxu0 0
      %390 = vmatmul.mubr.bf16.gmra.mxu0 %v347
      %v391 = vpop.f32.mrf.mxu0
      %v392 = vadd.f32 0.0, %v391
      %v393 = vpop.f32.mrf.mxu0
      %v394 = vpop.f32.mrf.mxu0
      %v395 = vadd.f32 0.0, %v394
      %v396 = vpop.f32.mrf.mxu0
      %397 = vdwg.mxu0
      %v398 = vpack.c.bf16 %v387, %v384
      %v399 = vpack.c.bf16 %v395, %v392
      %v402 = vunpack.c.l.b16 %v398
      %v403 = vunpack.c.h.b16 %v398
      %v404 = vunpack.c.l.b16 %v399
      %v405 = vunpack.c.h.b16 %v399
      %v406 = vpack.c.b16 %v402, %v402
      %v407 = vpack.c.b16 %v403, %v403
      %v408 = vpack.c.b16 %v404, %v404
      %v409 = vpack.c.b16 %v405, %v405
      %414 = vst [vmem:[%s280] sm:$0xf] %v406
      %415 = vst [vmem:[%s280 + $0x4] sm:$0xf] %v407
      %416 = vst [vmem:[%s280 + $0x8] sm:$0xf] %v408
      %417 = vst [vmem:[%s280 + $0xc] sm:$0xf] %v409
      %v418 = vld [vmem:[%s264] sm:$0x1]
      %v419 = vld [vmem:[%s1] sm:$0xff]
      %v420 = vld [vmem:[%s1 + $0x8] sm:$0xff]
      %v421 = vld [vmem:[%s1 + $0x10] sm:$0xff]
      %v422 = vld [vmem:[%s1 + $0x18] sm:$0xff]
      %v423 = vlaneseq
      %v424 = vshrl.u32 %v423, 7
      %v425 = vsub.s32 0, %v424
      %v426 = vrot.slane %v418, %v425
      %427 = vset.pattern.permute.xlu0 0
      %428 = vperm.xlu0 %427, %v419
      %v429 = vpop.permute.xlu0 %428
      %430 = vset.pattern.permute.xlu0 0
      %431 = vperm.xlu0 %430, %v420
      %v432 = vpop.permute.xlu0 %431
      %433 = vset.pattern.permute.xlu0 0
      %434 = vperm.xlu0 %433, %v421
      %v435 = vpop.permute.xlu0 %434
      %436 = vset.pattern.permute.xlu0 0
      %437 = vperm.xlu0 %436, %v422
      %v438 = vpop.permute.xlu0 %437
      %vm439 = vcmp.lt.s32.totalorder %v426, %v429
      %vm440 = vcmp.lt.s32.totalorder %v426, %v432
      %vm441 = vcmp.lt.s32.totalorder %v426, %v435
      %vm442 = vcmp.lt.s32.totalorder %v426, %v438
      %v443 = vld [vmem:[%s264 + $0x1] sm:$0x1]
      %v444 = vlaneseq
      %v445 = vshrl.u32 %v444, 7
      %v446 = vsub.s32 0, %v445
      %v447 = vrot.slane %v443, %v446
      %448 = vset.pattern.permute.xlu0 1
      %449 = vperm.xlu0 %448, %v419
      %v450 = vpop.permute.xlu0 %449
      %451 = vset.pattern.permute.xlu0 1
      %452 = vperm.xlu0 %451, %v420
      %v453 = vpop.permute.xlu0 %452
      %454 = vset.pattern.permute.xlu0 1
      %455 = vperm.xlu0 %454, %v421
      %v456 = vpop.permute.xlu0 %455
      %457 = vset.pattern.permute.xlu0 1
      %458 = vperm.xlu0 %457, %v422
      %v459 = vpop.permute.xlu0 %458
      %vm460 = vcmp.lt.s32.totalorder %v447, %v450
      %vm461 = vcmp.lt.s32.totalorder %v447, %v453
      %vm462 = vcmp.lt.s32.totalorder %v447, %v456
      %vm463 = vcmp.lt.s32.totalorder %v447, %v459
      %vm464 = vmand %vm439, %vm460
      %vm465 = vmand %vm440, %vm461
      %vm466 = vmand %vm441, %vm462
      %vm467 = vmand %vm442, %vm463
      %v468 = vsel %vm464, %v384, 0.0
      %v469 = vsel %vm465, %v387, 0.0
      %v470 = vsel %vm466, %v392, 0.0
      %v471 = vsel %vm467, %v395, 0.0
      %v472 = vld [vmem:[#allocation2] sm:$0xff]
      %v473 = vld [vmem:[#allocation2 + $0x8] sm:$0xff]
      %v474 = vld [vmem:[#allocation2 + $0x10] sm:$0xff]
      %v475 = vld [vmem:[#allocation2 + $0x18] sm:$0xff]
      %476 = vadd.xlane.f32.xlu0 %v468
      %v477 = vpop.xlane.xlu0 %476
      %478 = vadd.xlane.f32.xlu0 %v469
      %v479 = vpop.xlane.xlu0 %478
      %480 = vadd.xlane.f32.xlu0 %v470
      %v481 = vpop.xlane.xlu0 %480
      %482 = vadd.xlane.f32.xlu0 %v471
      %v483 = vpop.xlane.xlu0 %482
      %v484 = vmul.f32 %v468, %v468
      %v485 = vmul.f32 %v469, %v469
      %v486 = vmul.f32 %v470, %v470
      %v487 = vmul.f32 %v471, %v471
      %488 = vadd.xlane.f32.xlu0 %v484
      %v489 = vpop.xlane.xlu0 %488
      %490 = vadd.xlane.f32.xlu0 %v485
      %v491 = vpop.xlane.xlu0 %490
      %492 = vadd.xlane.f32.xlu0 %v486
      %v493 = vpop.xlane.xlu0 %492
      %494 = vadd.xlane.f32.xlu0 %v487
      %v495 = vpop.xlane.xlu0 %494
      %v496 = vmul.f32 %v468, %v470
      %v497 = vmul.f32 %v469, %v471
      %498 = vadd.xlane.f32.xlu0 %v496
      %v499 = vpop.xlane.xlu0 %498
      %500 = vadd.xlane.f32.xlu0 %v497
      %v501 = vpop.xlane.xlu0 %500
      %vm502 = vcmask 7168
      %v503 = vsel %vm502, %v477, %v489
      %v504 = vsel %vm502, %v479, %v491
      %v505 = vsel %vm502, %v481, %v493
      %v506 = vsel %vm502, %v483, %v495
      %vm507 = vcmask 15360
      %v508 = vsel %vm507, %v503, %v499
      %v509 = vsel %vm507, %v504, %v501
      %v510 = vsel %vm507, %v505, %v499
      %v511 = vsel %vm507, %v506, %v501
      %v512 = vadd.f32 %v472, %v508
      %v513 = vadd.f32 %v473, %v509
      %v514 = vadd.f32 %v474, %v510
      %v515 = vadd.f32 %v475, %v511
      %vm516 = vcmask 23552
      %517 = vst.msk [vmem:[#allocation2] sm:$0xff] %vm516, %v512
      %518 = vst.msk [vmem:[#allocation2 + $0x8] sm:$0xff] %vm516, %v513
      %519 = vst.msk [vmem:[#allocation2 + $0x10] sm:$0xff] %vm516, %v514
      %520 = vst.msk [vmem:[#allocation2 + $0x18] sm:$0xff] %vm516, %v515
      // Predicated region
      $region41: #{decoder_forward.2} parent=35 // pred_check
        %p521 = pneg %p287
      $region42: #{decoder_forward.2} parent=35 // pred_check_branch
        %523 = sbr.rel (%p521) target = $region44
      $region43: #{decoder_forward.2} parent=35 // pred_region
        %v524 = vld [vmem:[#allocation2] sm:$0xff]
        %v525 = vld [vmem:[#allocation2 + $0x8] sm:$0xff]
        %v526 = vld [vmem:[#allocation2 + $0x10] sm:$0xff]
        %v527 = vld [vmem:[#allocation2 + $0x18] sm:$0xff]
        %528 = vst.msk [vmem:[%s285] sm:$0xff] %vm516, %v524
        %529 = vst.msk [vmem:[%s285 + $0x8] sm:$0xff] %vm516, %v525
        %530 = vst.msk [vmem:[%s285 + $0x10] sm:$0xff] %vm516, %v526
        %531 = vst.msk [vmem:[%s285 + $0x18] sm:$0xff] %vm516, %v527
      $region44: #{decoder_forward.2} parent=35 // pred_fallthru
        _
      %p532 = scmp.lt.s32.totalorder %s21, 1
      %s533 = scalar_select %p532, %s21, 1
      %p534 = scmp.lt.s32.totalorder %s22, 0
      %s535 = scalar_select %p534, %s22, 0
      %s536 = smul.addr %s533, 4
      %s537 = sadd.s32 %s535, %s536
      %s538 = smul.addr %s537, 4
      %s539 = scalar_lea.vmem %s4, %s538
      %p540 = scmp.lt.s32.totalorder %s21, 1
      %s541 = scalar_select %p540, %s21, 1
      %s542 = smul.addr %s541, 4
      %s543 = smul.addr %s542, 8
      %s544 = scalar_lea.vmem %s5, %s543
      // Predicated region
      $region45: #{decoder_forward.2} parent=35 // pred_check
        %p545 = pneg %p145
      $region46: #{decoder_forward.2} parent=35 // pred_check_branch
        %547 = sbr.rel (%p545) target = $region48
      $region47: #{decoder_forward.2} parent=35 // pred_region
        _
      $region48: #{decoder_forward.2} parent=35 // pred_fallthru
        _
      // Predicated region
      $region49: #{decoder_forward.2} parent=35 // pred_check
        %p548 = pneg %p171
      $region50: #{decoder_forward.2} parent=35 // pred_check_branch
        %550 = sbr.rel (%p548) target = $region52
      $region51: #{decoder_forward.2} parent=35 // pred_region
        _
      $region52: #{decoder_forward.2} parent=35 // pred_fallthru
        _
    $region36: #{decoder_forward.2} parent=5 // pred_fallthru
      _
    %p551 = scmp.le.s32.totalorder 2, %s12
    // Predicated region
    $region53: #{decoder_forward.2} parent=5 // pred_check
      %p552 = pneg %p551
    $region54: #{decoder_forward.2} parent=5 // pred_check_branch
      %554 = sbr.rel (%p552) target = $region56
    $region55: #{decoder_forward.2} parent=5 // pred_region
      %s555 = ssub.s32 %s12, 2
      // Predicated region
      $region57: #{decoder_forward.2} parent=55 // pred_check
        %p556 = pneg %p151
      $region58: #{decoder_forward.2} parent=55 // pred_check_branch
        %558 = sbr.rel (%p556) target = $region60
      $region59: #{decoder_forward.2} parent=55 // pred_region
        %p559 = scmp.lt.s32.totalorder %s23, 1
        %s560 = scalar_select %p559, %s23, 1
        %p561 = scmp.lt.s32.totalorder %s24, 0
        %s562 = scalar_select %p561, %s24, 0
        %s563 = smul.addr %s560, 4
        %s564 = sadd.s32 %s562, %s563
        %s565 = smul.addr %s564, 4
        %s566 = scalar_lea.vmem %s4, %s565
      $region60: #{decoder_forward.2} parent=55 // pred_fallthru
        _
      // Predicated region
      $region61: #{decoder_forward.2} parent=55 // pred_check
        %p567 = pneg %p177
      $region62: #{decoder_forward.2} parent=55 // pred_check_branch
        %569 = sbr.rel (%p567) target = $region64
      $region63: #{decoder_forward.2} parent=55 // pred_region
        %p570 = scmp.lt.s32.totalorder %s23, 1
        %s571 = scalar_select %p570, %s23, 1
        %s572 = smul.addr %s571, 4
        %s573 = smul.addr %s572, 8
        %s574 = scalar_lea.vmem %s5, %s573
      $region64: #{decoder_forward.2} parent=55 // pred_fallthru
        _
    $region56: #{decoder_forward.2} parent=5 // pred_fallthru
      _
  $region6: #{decoder_forward.2} parent=0 // loop_footer
    %s16 = sadd.s32 1, %s12
  $region7: #{decoder_forward.2} parent=0 // loop_footer_branch
    %11 = sbr.rel target = $region3
  $region8: #{decoder_forward.2} parent=0 // loop_exit
    _

</llo_original>
